<compile_context>
chip_gen: v7x
topology: tpu7x:2x2x1
jax: 0.10.0
libtpu: 0.0.40
codegen_flags: <defaults>
</compile_context>

<pallas_src>
import functools

import jax
import jax.numpy as jnp
from jax.experimental import pallas as pl
from jax.experimental.pallas import tpu as pltpu


def _ntxent_tile_kernel(row_ref, col_ref, part_ref, out_ref, acc_ref, *,
                        temperature: float, eps: float = 1e-8):
    """One (row-tile, col-tile) step of the tiled NT-Xent log-sum-exp."""
    j = pl.program_id(1)
    inv_t = 1.0 / temperature
    inv_sqrt_t = 1.0 / (temperature ** 0.5)

    def _normalize(x):
        # Cosine direction scaled by 1/sqrt(T): folding T into both operands
        # makes the MXU emit logits = cos(i,j)/T directly.  Clamping each
        # squared norm at eps clamps each norm at sqrt(eps), matching
        # torch.nn.CosineSimilarity(eps=1e-8) for non-degenerate rows.
        x = x.astype(jnp.float32)
        sumsq = jnp.sum(x * x, axis=-1, keepdims=True)
        inv = jax.lax.rsqrt(jnp.maximum(sumsq, eps))            # EUP rsqrt
        return x * (inv * inv_sqrt_t)

    @pl.when(j == 0)
    def _():
        acc_ref[...] = jnp.zeros_like(acc_ref)

    # bf16 MXU operands, f32 accumulation.
    row_bf = _normalize(row_ref[...]).astype(jnp.bfloat16)      # (TM, D)
    col_bf = _normalize(col_ref[...]).astype(jnp.bfloat16)      # (TN, D)

    logits = jax.lax.dot_general(
        row_bf, col_bf,
        dimension_numbers=(((1,), (1,)), ((), ())),
        preferred_element_type=jnp.float32)                     # (TM, TN)

    # Constant LSE shift m = 1/T (cosine <= 1 => logits <= 1/T up to bf16
    # rounding): no data-dependent max reduce, no diagonal mask, one exp per
    # element.
    acc_ref[...] += jnp.sum(jnp.exp(logits - inv_t), axis=-1, keepdims=True)

    @pl.when(j == pl.num_programs(1) - 1)
    def _():
        rb = row_bf.astype(jnp.float32)
        # Diagonal correction: the MXU contributed exp(||row_bf[r]||^2 - 1/T)
        # for the self-similarity column (bf16 products are exact in f32);
        # subtract it instead of masking a full tile.
        diag = jnp.sum(rb * rb, axis=-1, keepdims=True)          # (TM, 1)
        # Positive logits: partner block holds rows (r + B) mod 2B.
        pb = _normalize(part_ref[...]).astype(jnp.bfloat16).astype(jnp.float32)
        pos = jnp.sum(rb * pb, axis=-1, keepdims=True)           # (TM, 1)
        lse = inv_t + jnp.log(acc_ref[...] - jnp.exp(diag - inv_t))
        out_ref[...] = lse - pos                                 # per-row loss


def _vmem_capacity_bytes():
    # Generation-aware VMEM: v5e/v6e have 128 MiB per TensorCore, v7x 64 MiB.
    try:
        info = pltpu.get_tpu_info()
        cap = getattr(info, "vmem_capacity_bytes", None)
        if cap:
            return int(cap)
    except Exception:
        pass
    return 64 * 1024 * 1024  # conservative fallback (v7x per-TC)


def _pick_tile(n, cap, multiple=8):
    """Largest divisor of n that is <= cap and a multiple of `multiple`."""
    for d in range(min(cap, n), 0, -1):
        if n % d == 0 and d % multiple == 0:
            return d
    raise ValueError(f"no legal tile for extent {n} (need a multiple of "
                     f"{multiple}); pad the batch in the caller")


def ntxent_loss(zis, zjs, temperature=0.5, *, tm=None, tn=None):
    assert zis.shape == zjs.shape and zis.ndim == 2
    b, d = zis.shape
    assert b % 8 == 0, "batch size must be a multiple of 8 (pad in the caller)"
    two_b = 2 * b

    # representations = cat([zjs, zis], dim=0) — wrapper-side layout plumbing.
    # Keep the input dtype (bf16 inputs cross the HBM boundary in bf16; the
    # kernel upcasts/normalizes in VMEM).
    rep = jnp.concatenate([zjs, zis], axis=0)                    # (2B, D)

    # Row tile must divide B so the positive-partner block is a whole block.
    if tm is None:
        tm = _pick_tile(b, 256)
    if tn is None:
        tn = _pick_tile(two_b, 512)
    assert b % tm == 0 and two_b % tn == 0
    row_blocks = two_b // tm
    col_blocks = two_b // tn
    half_shift = b // tm                                          # blocks per half

    kernel = functools.partial(_ntxent_tile_kernel,
                               temperature=float(temperature))

    itemsize = jnp.dtype(rep.dtype).itemsize
    # Live per-step: logits + exp temporaries, double-buffered input tiles,
    # accumulator/output slivers.  Generous 2x margin, capped below physical.
    footprint = (3 * tm * tn * 4
                 + (2 * tn + 4 * tm) * d * itemsize
                 + 16 * tm * 4)
    cap = int(0.85 * _vmem_capacity_bytes())
    vmem_bytes = max(1 << 20, min(cap, max(16 << 20, 2 * footprint)))

    cost = pl.CostEstimate(
        flops=2 * two_b * two_b * d + 12 * two_b * d,
        transcendentals=two_b * two_b + 2 * two_b * (col_blocks + 2),
        bytes_accessed=two_b * d * itemsize * (2 + row_blocks) + two_b * 4)

    per_row = pl.pallas_call(
        kernel,
        out_shape=jax.ShapeDtypeStruct((two_b, 1), jnp.float32),
        grid_spec=pltpu.PrefetchScalarGridSpec(
            num_scalar_prefetch=0,
            grid=(row_blocks, col_blocks),
            in_specs=[
                # row tile (fetched once per i)
                pl.BlockSpec((tm, d), lambda i, j: (i, 0)),
                # column tile (streamed along the reduction axis)
                pl.BlockSpec((tn, d), lambda i, j: (j, 0)),
                # positive-partner row tile: rows (r + B) mod 2B
                pl.BlockSpec((tm, d),
                             lambda i, j: ((i + half_shift) % row_blocks, 0)),
            ],
            out_specs=pl.BlockSpec((tm, 1), lambda i, j: (i, 0)),
            scratch_shapes=[pltpu.VMEM((tm, 1), jnp.float32)],   # running sum
        ),
        compiler_params=pltpu.CompilerParams(
            dimension_semantics=("parallel", "arbitrary"),
            vmem_limit_bytes=int(vmem_bytes)),
        cost_estimate=cost,
    )(rep, rep, rep)

    # loss = sum_i (lse_i - pos_i) / 2B ; the (2B,1) reduce is trivial XLA.
    return jnp.sum(per_row) / two_b


def _ntxent_loss_ref(zis, zjs, temperature=0.5):
    # Pure-JAX (f32) reference mirroring the PyTorch forward exactly.
    b = zis.shape[0]
    rep = jnp.concatenate([zjs, zis], axis=0)
    norms = jnp.linalg.norm(rep, axis=-1, keepdims=True)
    sim = (rep @ rep.T) / jnp.maximum(norms * norms.T, 1e-8)
    two_b = 2 * b
    l_pos = jnp.diagonal(sim, offset=b)
    r_pos = jnp.diagonal(sim, offset=-b)
    positives = jnp.concatenate([l_pos, r_pos]).reshape(two_b, 1)
    eye = jnp.eye(two_b)
    off1 = jnp.eye(two_b, k=-b)
    off2 = jnp.eye(two_b, k=b)
    mask = (1 - (eye + off1 + off2)).astype(bool)
    negatives = sim[mask].reshape(two_b, two_b - 2)
    logits = jnp.concatenate([positives, negatives], axis=1) / temperature
    lse = jax.scipy.special.logsumexp(logits, axis=-1)
    loss = jnp.sum(lse - logits[:, 0])
    return loss / two_b


if __name__ == "__main__":
    key = jax.random.PRNGKey(0)
    k1, k2 = jax.random.split(key)
    temperature = 0.5

    # Small case: grid degenerates to (2, 1).
    B, D = 8, 32
    zis = jax.random.normal(k1, (B, D), dtype=jnp.float32)
    zjs = jax.random.normal(k2, (B, D), dtype=jnp.float32)
    loss = jax.block_until_ready(ntxent_loss(zis, zjs, temperature))
    ref = jax.block_until_ready(_ntxent_loss_ref(zis, zjs, temperature))
    # bf16 MXU operands carry ~3 significant digits -> loose tolerance.
    assert jnp.allclose(loss, ref, rtol=3e-2, atol=2e-2), (loss, ref)

    # Multi-tile case: exercises accumulator init/finalize and the
    # positive-partner block index_map on a (4, 4) grid.
    k3, k4 = jax.random.split(k2)
    B2, D2 = 16, 32
    zis2 = jax.random.normal(k3, (B2, D2), dtype=jnp.float32)
    zjs2 = jax.random.normal(k4, (B2, D2), dtype=jnp.float32)
    loss2 = jax.block_until_ready(ntxent_loss(zis2, zjs2, temperature, tm=8, tn=8))
    ref2 = jax.block_until_ready(_ntxent_loss_ref(zis2, zjs2, temperature))
    assert jnp.allclose(loss2, ref2, rtol=3e-2, atol=2e-2), (loss2, ref2)

    print("KERNEL_OK")
</pallas_src>

<mosaic_0001>
module attributes {stable_mosaic.version = 11 : i64} {
  func.func @_ntxent_tile_kernel(%arg0: i32, %arg1: i32, %arg2: memref<8x32xf32, #tpu.memory_space<vmem>>, %arg3: memref<16x32xf32, #tpu.memory_space<vmem>>, %arg4: memref<8x32xf32, #tpu.memory_space<vmem>>, %arg5: memref<8x1xf32, #tpu.memory_space<vmem>>, %arg6: memref<8x1xf32, #tpu.memory_space<vmem>>) attributes {dimension_semantics = [#tpu.dimension_semantics<parallel>, #tpu.dimension_semantics<arbitrary>], iteration_bounds = array<i64: 2, 1>, scalar_prefetch = 0 : i64, scratch_operands = 1 : i64, tpu.core_type = #tpu.core_type<tc>, window_params = [{transform_indices = @transform_0, window_bounds = array<i64: 8, 32>}, {transform_indices = @transform_1, window_bounds = array<i64: 16, 32>}, {transform_indices = @transform_2, window_bounds = array<i64: 8, 32>}, {transform_indices = @transform_3, window_bounds = array<i64: 8, 1>}]} {
    %c0_i32 = arith.constant 0 : i32
    %0 = arith.cmpi eq, %arg1, %c0_i32 : i32
    %1 = arith.extui %0 : i1 to i32
    %c0_i32_0 = arith.constant 0 : i32
    %2 = arith.cmpi ne, %1, %c0_i32_0 : i32
    scf.if %2 {
      %cst_18 = arith.constant 0.000000e+00 : f32
      %39 = vector.broadcast %cst_18 : f32 to vector<8x1xf32>
      %c0_19 = arith.constant 0 : index
      %c0_20 = arith.constant 0 : index
      %40 = vector.load %arg6[%c0_19, %c0_20] : memref<8x1xf32, #tpu.memory_space<vmem>>, vector<8x1xf32>
      tpu.vector_store %arg6[%c0_19, %c0_20], %39 {strides = array<i32>} : memref<8x1xf32, #tpu.memory_space<vmem>>, vector<8x1xf32>,
    } else {
    }
    %c0 = arith.constant 0 : index
    %c0_1 = arith.constant 0 : index
    %3 = vector.load %arg2[%c0, %c0_1] : memref<8x32xf32, #tpu.memory_space<vmem>>, vector<8x32xf32>
    %4 = arith.mulf %3, %3 : vector<8x32xf32>
    %cst = arith.constant dense<0.000000e+00> : vector<8xf32>
    %5 = vector.multi_reduction <add>, %4, %cst [1] : vector<8x32xf32> to vector<8xf32>
    %6 = vector.shape_cast %5 : vector<8xf32> to vector<8x1xf32>
    %cst_2 = arith.constant 9.99999993E-9 : f32
    %7 = vector.broadcast %cst_2 : f32 to vector<8x1xf32>
    %8 = arith.maximumf %6, %7 : vector<8x1xf32>
    %9 = math.rsqrt %8 : vector<8x1xf32>
    %cst_3 = arith.constant 1.41421354 : f32
    %10 = vector.broadcast %cst_3 : f32 to vector<8x1xf32>
    %11 = arith.mulf %9, %10 : vector<8x1xf32>
    %12 = vector.broadcast %11 : vector<8x1xf32> to vector<8x32xf32>
    %13 = arith.mulf %3, %12 : vector<8x32xf32>
    %14 = arith.truncf %13 : vector<8x32xf32> to vector<8x32xbf16>
    %c0_4 = arith.constant 0 : index
    %c0_5 = arith.constant 0 : index
    %15 = vector.load %arg3[%c0_4, %c0_5] : memref<16x32xf32, #tpu.memory_space<vmem>>, vector<16x32xf32>
    %16 = arith.mulf %15, %15 : vector<16x32xf32>
    %cst_6 = arith.constant dense<0.000000e+00> : vector<16xf32>
    %17 = vector.multi_reduction <add>, %16, %cst_6 [1] : vector<16x32xf32> to vector<16xf32>
    %18 = vector.shape_cast %17 : vector<16xf32> to vector<16x1xf32>
    %cst_7 = arith.constant 9.99999993E-9 : f32
    %19 = vector.broadcast %cst_7 : f32 to vector<16x1xf32>
    %20 = arith.maximumf %18, %19 : vector<16x1xf32>
    %21 = math.rsqrt %20 : vector<16x1xf32>
    %cst_8 = arith.constant 1.41421354 : f32
    %22 = vector.broadcast %cst_8 : f32 to vector<16x1xf32>
    %23 = arith.mulf %21, %22 : vector<16x1xf32>
    %24 = vector.broadcast %23 : vector<16x1xf32> to vector<16x32xf32>
    %25 = arith.mulf %15, %24 : vector<16x32xf32>
    %26 = arith.truncf %25 : vector<16x32xf32> to vector<16x32xbf16>
    %cst_9 = arith.constant dense<0.000000e+00> : vector<8x16xf32>
    %27 = tpu.matmul %14, %26, %cst_9 {dimension_numbers = #tpu.dot_dimension_numbers<[1], [1], [0], [0], [0, 0, 1, 0], [], []>} : vector<8x32xbf16>, vector<16x32xbf16>, vector<8x16xf32> -> vector<8x16xf32>
    %c0_10 = arith.constant 0 : index
    %c0_11 = arith.constant 0 : index
    %28 = vector.load %arg6[%c0_10, %c0_11] : memref<8x1xf32, #tpu.memory_space<vmem>>, vector<8x1xf32>
    %cst_12 = arith.constant 2.000000e+00 : f32
    %29 = vector.broadcast %cst_12 : f32 to vector<8x16xf32>
    %30 = arith.subf %27, %29 : vector<8x16xf32>
    %31 = math.exp %30 : vector<8x16xf32>
    %cst_13 = arith.constant dense<0.000000e+00> : vector<8xf32>
    %32 = vector.multi_reduction <add>, %31, %cst_13 [1] : vector<8x16xf32> to vector<8xf32>
    %33 = vector.shape_cast %32 : vector<8xf32> to vector<8x1xf32>
    %34 = arith.addf %28, %33 : vector<8x1xf32>
    %c0_14 = arith.constant 0 : index
    %c0_15 = arith.constant 0 : index
    %35 = vector.load %arg6[%c0_14, %c0_15] : memref<8x1xf32, #tpu.memory_space<vmem>>, vector<8x1xf32>
    tpu.vector_store %arg6[%c0_14, %c0_15], %34 {strides = array<i32>} : memref<8x1xf32, #tpu.memory_space<vmem>>, vector<8x1xf32>,
    %c0_i32_16 = arith.constant 0 : i32
    %36 = arith.cmpi eq, %arg1, %c0_i32_16 : i32
    %37 = arith.extui %36 : i1 to i32
    %c0_i32_17 = arith.constant 0 : i32
    %38 = arith.cmpi ne, %37, %c0_i32_17 : i32
    scf.if %38 {
      %39 = arith.extf %14 : vector<8x32xbf16> to vector<8x32xf32>
      %40 = arith.mulf %39, %39 : vector<8x32xf32>
      %cst_18 = arith.constant dense<0.000000e+00> : vector<8xf32>
      %41 = vector.multi_reduction <add>, %40, %cst_18 [1] : vector<8x32xf32> to vector<8xf32>
      %42 = vector.shape_cast %41 : vector<8xf32> to vector<8x1xf32>
      %c0_19 = arith.constant 0 : index
      %c0_20 = arith.constant 0 : index
      %43 = vector.load %arg4[%c0_19, %c0_20] : memref<8x32xf32, #tpu.memory_space<vmem>>, vector<8x32xf32>
      %44 = arith.mulf %43, %43 : vector<8x32xf32>
      %cst_21 = arith.constant dense<0.000000e+00> : vector<8xf32>
      %45 = vector.multi_reduction <add>, %44, %cst_21 [1] : vector<8x32xf32> to vector<8xf32>
      %46 = vector.shape_cast %45 : vector<8xf32> to vector<8x1xf32>
      %cst_22 = arith.constant 9.99999993E-9 : f32
      %47 = vector.broadcast %cst_22 : f32 to vector<8x1xf32>
      %48 = arith.maximumf %46, %47 : vector<8x1xf32>
      %49 = math.rsqrt %48 : vector<8x1xf32>
      %cst_23 = arith.constant 1.41421354 : f32
      %50 = vector.broadcast %cst_23 : f32 to vector<8x1xf32>
      %51 = arith.mulf %49, %50 : vector<8x1xf32>
      %52 = vector.broadcast %51 : vector<8x1xf32> to vector<8x32xf32>
      %53 = arith.mulf %43, %52 : vector<8x32xf32>
      %54 = arith.truncf %53 : vector<8x32xf32> to vector<8x32xbf16>
      %55 = arith.extf %54 : vector<8x32xbf16> to vector<8x32xf32>
      %56 = arith.mulf %39, %55 : vector<8x32xf32>
      %cst_24 = arith.constant dense<0.000000e+00> : vector<8xf32>
      %57 = vector.multi_reduction <add>, %56, %cst_24 [1] : vector<8x32xf32> to vector<8xf32>
      %58 = vector.shape_cast %57 : vector<8xf32> to vector<8x1xf32>
      %c0_25 = arith.constant 0 : index
      %c0_26 = arith.constant 0 : index
      %59 = vector.load %arg6[%c0_25, %c0_26] : memref<8x1xf32, #tpu.memory_space<vmem>>, vector<8x1xf32>
      %cst_27 = arith.constant 2.000000e+00 : f32
      %60 = vector.broadcast %cst_27 : f32 to vector<8x1xf32>
      %61 = arith.subf %42, %60 : vector<8x1xf32>
      %62 = math.exp %61 : vector<8x1xf32>
      %63 = arith.subf %59, %62 : vector<8x1xf32>
      %64 = math.log %63 : vector<8x1xf32>
      %cst_28 = arith.constant 2.000000e+00 : f32
      %65 = vector.broadcast %cst_28 : f32 to vector<8x1xf32>
      %66 = arith.addf %65, %64 : vector<8x1xf32>
      %67 = arith.subf %66, %58 : vector<8x1xf32>
      %c0_29 = arith.constant 0 : index
      %c0_30 = arith.constant 0 : index
      %68 = vector.load %arg5[%c0_29, %c0_30] : memref<8x1xf32, #tpu.memory_space<vmem>>, vector<8x1xf32>
      tpu.vector_store %arg5[%c0_29, %c0_30], %67 {strides = array<i32>} : memref<8x1xf32, #tpu.memory_space<vmem>>, vector<8x1xf32>,
    } else {
    }
    return
  }
  func.func @transform_0(%arg0: i32, %arg1: i32) -> (i32, i32) {
    %c0_i32 = arith.constant 0 : i32
    %c0_i32_0 = arith.constant 0 : i32
    return %arg0, %c0_i32 : i32, i32
  }
  func.func @transform_1(%arg0: i32, %arg1: i32) -> (i32, i32) {
    %c0_i32 = arith.constant 0 : i32
    %c0_i32_0 = arith.constant 0 : i32
    return %arg1, %c0_i32 : i32, i32
  }
  func.func @transform_2(%arg0: i32, %arg1: i32) -> (i32, i32) {
    %c1_i32 = arith.constant 1 : i32
    %0 = arith.addi %arg0, %c1_i32 : i32
    %c2_i32 = arith.constant 2 : i32
    %c0_i32 = arith.constant 0 : i32
    %1 = arith.cmpi eq, %c2_i32, %c0_i32 : i32
    %c1_i32_0 = arith.constant 1 : i32
    %2 = arith.select %1, %c1_i32_0, %c2_i32 : i32
    %3 = arith.remsi %0, %2 : i32
    %c0_i32_1 = arith.constant 0 : i32
    %4 = arith.cmpi ne, %3, %c0_i32_1 : i32
    %c0_i32_2 = arith.constant 0 : i32
    %5 = arith.cmpi slt, %3, %c0_i32_2 : i32
    %c0_i32_3 = arith.constant 0 : i32
    %6 = arith.cmpi slt, %2, %c0_i32_3 : i32
    %7 = arith.xori %5, %6 : i1
    %8 = arith.andi %7, %4 : i1
    %9 = arith.addi %3, %2 : i32
    %10 = arith.select %8, %9, %3 : i32
    %c0_i32_4 = arith.constant 0 : i32
    %c0_i32_5 = arith.constant 0 : i32
    return %10, %c0_i32_4 : i32, i32
  }
  func.func @transform_3(%arg0: i32, %arg1: i32) -> (i32, i32) {
    %c0_i32 = arith.constant 0 : i32
    %c0_i32_0 = arith.constant 0 : i32
    return %arg0, %c0_i32 : i32, i32
  }
}

</mosaic_0001>

<llo_original>
// kernel: tpu_custom_call.1
$region0: #{tpu_custom_call.1}
  #allocation0 [shape = 'u32[]', space=smem, size = 0x4, offset = 0x4, fixed_abs, tag = 'smem constant byte address 0x4 - core index']
  #allocation1 [shape = 'u32[144,128]{1,0:T(1,128)}', space=vmem, size = 0x12000, scoped, tag = 'internal scratch']
  #allocation2 [shape = 'f32[8,1]{1,0:T(8,128)}', space=vmem, size = 0x1000, scoped, tag = 'scratch operand']
  %s0 = inlined_call_operand.hbm [shape: f32[16,32], index: 0, kind: input, shape index: {}]
  %s1 = inlined_call_operand.hbm [shape: f32[16,32], index: 1, kind: input, shape index: {}]
  %s2 = inlined_call_operand.hbm [shape: f32[16,32], index: 2, kind: input, shape index: {}]
  %s3 = inlined_call_operand.vmem [shape: f32[16,1], index: 3, kind: output, shape index: {}]
  %s4 = sld [smem:[#allocation0]]
  $region65: #{tpu_custom_call.1} parent=0
    _
  %s6 = ssub.s32 1, %s4
  %s7 = scalar_select 0, %s6, %s4
  $region1: #{tpu_custom_call.1} parent=0
    #allocation3 [shape = 'u8[8192]{0}', space=vmem, size = 0x2000, scoped, tag = 'input window, operand 0']
    #allocation4 [shape = 's32[2]{0}', space=sflag, size = 0x8, scoped, tag = 'scoped memory for tpu_custom_call.1']
    #allocation5 [shape = 'u8[8192]{0}', space=vmem, size = 0x2000, scoped, tag = 'input window, operand 1, single buffered']
    #allocation6 [shape = 's32[1]{0}', space=sflag, size = 0x4, scoped, tag = 'scoped memory for tpu_custom_call.1']
    #allocation7 [shape = 'u8[8192]{0}', space=vmem, size = 0x2000, scoped, tag = 'input window, operand 2']
    %8 = vsyncpa [#allocation4], 0
    %s9 = scalar_lea.sflag [#allocation4], 1
    %10 = vsyncpa %s9, 0
    %11 = vsyncpa [#allocation6], 0
    loop: start=0, step=1, limit=4
    $region2: #{tpu_custom_call.1} parent=1 // loop_pre_header
      _
    $region3: #{tpu_custom_call.1} parent=1 // loop_header
      %s13 = sphi 0, %s17
      %p14 = scmp.ge.s32.totalorder %s13, 4
      %s20 = sphi 0, %s32
      %s21 = sphi 0, %s28
      %s22 = sphi 0, %s20
      %s23 = sphi 0, %s21
      %s24 = sphi 0, %s22
      %s25 = sphi 0, %s23
      %s35 = sphi 0, %s37
      %s38 = sphi 0, %s35
      %s39 = sphi 0, %s38
      %s55 = sphi 0, %s39
      %s61 = sphi 0, %s63
      %s64 = sphi 0, %s61
      %s65 = sphi 0, %s64
      %s81 = sphi 0, %s65
      %s113 = sphi 0, %s115
      %s116 = sphi 0, %s113
      %s117 = sphi 0, %s116
      %s133 = sphi 0, %s117
      %s139 = sphi 0, %s141
      %s142 = sphi 0, %s139
      %s143 = sphi 0, %s142
      %s159 = sphi 0, %s143
    $region4: #{tpu_custom_call.1} parent=1 // loop_header_branch
      %16 = sbr.rel (%p14) target = $region8
    $region5: #{tpu_custom_call.1} parent=1 // loop_body
      %s18 = ssub.s32 %s13, 1
      %s19 = ssub.s32 %s13, 2
      %s26 = sadd.s32 1, %s21
      %p27 = scmp.ge.s32.totalorder %s26, 1
      %s28 = scalar_select %p27, 0, %s26
      %s29 = sadd.s32 1, %s20
      %s30 = scalar_select %p27, %s29, %s20
      %p31 = scmp.ge.s32.totalorder %s30, 2
      %s32 = scalar_select %p31, 0, %s30
      %s33 = ssub.s32 %s20, %s32
      %p34 = scmp.eq.s32.totalorder %s33, 0
      %s36 = sadd.s32 %s35, 1
      %s37 = scalar_select %p34, %s35, %s36
      %p40 = pneg %p34
      %p41 = scmp.eq.s32.totalorder %s13, 1
      %p42 = por %p40, %p41
      %p43 = scmp.ne.s32.totalorder %s35, %s38
      %p44 = scmp.eq.s32.totalorder %s13, 0
      %p45 = por %p43, %p44
      %p46 = scmp.ne.s32.totalorder %s35, %s38
      %p47 = scmp.eq.s32.totalorder %s18, 1
      %p48 = por %p46, %p47
      %p49 = scmp.ne.s32.totalorder %s38, %s39
      %p50 = scmp.eq.s32.totalorder %s18, 0
      %p51 = por %p49, %p50
      %p52 = scmp.ne.s32.totalorder %s38, %s39
      %p53 = scmp.eq.s32.totalorder %s19, 1
      %p54 = por %p52, %p53
      %p56 = scmp.ne.s32.totalorder %s39, %s55
      %p57 = scmp.eq.s32.totalorder %s19, 0
      %p58 = por %p56, %p57
      %s59 = ssub.s32 %s21, %s28
      %p60 = scmp.eq.s32.totalorder %s59, 0
      %s62 = sadd.s32 %s61, 1
      %s63 = scalar_select %p60, %s61, %s62
      %p66 = pneg %p60
      %p67 = scmp.eq.s32.totalorder %s13, 1
      %p68 = por %p66, %p67
      %p69 = scmp.ne.s32.totalorder %s61, %s64
      %p70 = scmp.eq.s32.totalorder %s13, 0
      %p71 = por %p69, %p70
      %p72 = scmp.ne.s32.totalorder %s61, %s64
      %p73 = scmp.eq.s32.totalorder %s18, 1
      %p74 = por %p72, %p73
      %p75 = scmp.ne.s32.totalorder %s64, %s65
      %p76 = scmp.eq.s32.totalorder %s18, 0
      %p77 = por %p75, %p76
      %p78 = scmp.ne.s32.totalorder %s64, %s65
      %p79 = scmp.eq.s32.totalorder %s19, 1
      %p80 = por %p78, %p79
      %p82 = scmp.ne.s32.totalorder %s65, %s81
      %p83 = scmp.eq.s32.totalorder %s19, 0
      %p84 = por %p82, %p83
      %s85 = sadd.s32 %s20, 1
      %p86 = scmp.lt.s32.totalorder %s85, 0
      %s87 = ssub.s32 0, %s85
      %s88 = scalar_select %p86, %s87, %s85
      %s89 = sand.u32 %s88, 1
      %s90 = ssub.s32 0, %s89
      %s91 = scalar_select %p86, %s90, %s89
      %p92 = scmp.ne.s32.totalorder %s91, 0
      %p93 = scmp.lt.s32.totalorder %s91, 0
      %p94 = pnand %p93, %p92
      %p95 = pneg %p94
      %s96 = sadd.s32 %s91, 2
      %s97 = scalar_select %p95, %s96, %s91
      %s98 = sadd.s32 %s32, 1
      %p99 = scmp.lt.s32.totalorder %s98, 0
      %s100 = ssub.s32 0, %s98
      %s101 = scalar_select %p99, %s100, %s98
      %s102 = sand.u32 %s101, 1
      %s103 = ssub.s32 0, %s102
      %s104 = scalar_select %p99, %s103, %s102
      %p105 = scmp.ne.s32.totalorder %s104, 0
      %p106 = scmp.lt.s32.totalorder %s104, 0
      %p107 = pnand %p106, %p105
      %p108 = pneg %p107
      %s109 = sadd.s32 %s104, 2
      %s110 = scalar_select %p108, %s109, %s104
      %s111 = ssub.s32 %s97, %s110
      %p112 = scmp.eq.s32.totalorder %s111, 0
      %s114 = sadd.s32 %s113, 1
      %s115 = scalar_select %p112, %s113, %s114
      %p118 = pneg %p112
      %p119 = scmp.eq.s32.totalorder %s13, 1
      %p120 = por %p118, %p119
      %p121 = scmp.ne.s32.totalorder %s113, %s116
      %p122 = scmp.eq.s32.totalorder %s13, 0
      %p123 = por %p121, %p122
      %p124 = scmp.ne.s32.totalorder %s113, %s116
      %p125 = scmp.eq.s32.totalorder %s18, 1
      %p126 = por %p124, %p125
      %p127 = scmp.ne.s32.totalorder %s116, %s117
      %p128 = scmp.eq.s32.totalorder %s18, 0
      %p129 = por %p127, %p128
      %p130 = scmp.ne.s32.totalorder %s116, %s117
      %p131 = scmp.eq.s32.totalorder %s19, 1
      %p132 = por %p130, %p131
      %p134 = scmp.ne.s32.totalorder %s117, %s133
      %p135 = scmp.eq.s32.totalorder %s19, 0
      %p136 = por %p134, %p135
      %s137 = ssub.s32 %s20, %s32
      %p138 = scmp.eq.s32.totalorder %s137, 0
      %s140 = sadd.s32 %s139, 1
      %s141 = scalar_select %p138, %s139, %s140
      %p144 = pneg %p138
      %p145 = scmp.eq.s32.totalorder %s13, 1
      %p146 = por %p144, %p145
      %p147 = scmp.ne.s32.totalorder %s139, %s142
      %p148 = scmp.eq.s32.totalorder %s13, 0
      %p149 = por %p147, %p148
      %p150 = scmp.ne.s32.totalorder %s139, %s142
      %p151 = scmp.eq.s32.totalorder %s18, 1
      %p152 = por %p150, %p151
      %p153 = scmp.ne.s32.totalorder %s142, %s143
      %p154 = scmp.eq.s32.totalorder %s18, 0
      %p155 = por %p153, %p154
      %p156 = scmp.ne.s32.totalorder %s142, %s143
      %p157 = scmp.eq.s32.totalorder %s19, 1
      %p158 = por %p156, %p157
      %p160 = scmp.ne.s32.totalorder %s143, %s159
      %p161 = scmp.eq.s32.totalorder %s19, 0
      %p162 = por %p160, %p161
      %p163 = scmp.le.s32.totalorder 1, %s13
      %p164 = scmp.lt.s32.totalorder %s13, 3
      %p165 = pnand %p163, %p164
      %p166 = pneg %p165
      // Predicated region
      $region9: #{tpu_custom_call.1} parent=5 // pred_check
        _
      $region10: #{tpu_custom_call.1} parent=5 // pred_check_branch
        %168 = sbr.rel (%p165) target = $region12
      $region11: #{tpu_custom_call.1} parent=5 // pred_region
        %s169 = ssub.s32 %s13, 1
        // Predicated region
        $region13: #{tpu_custom_call.1} parent=11 // pred_check
          %p170 = pneg %p77
        $region14: #{tpu_custom_call.1} parent=11 // pred_check_branch
          %172 = sbr.rel (%p170) target = $region16
        $region15: #{tpu_custom_call.1} parent=11 // pred_region
          %s173 = smul.u32 2, %s23
          %s175 = ssub.s32 256, 256
          %176 = vsyncadd [#allocation6], %s175
          %s177 = smul.addr %s173, 128
          %s178 = scalar_lea.hbm %s1, %s177
          %s179 = sshll.u32 [#allocation5], 4
          %s180 = int_to_ptr.vmem [resolvable:$true] %s179
          %185 = dma.hbm_to_vmem [thread:$0]  %s178, 256, %s180, [#allocation6], 128, 128, 8
        $region16: #{tpu_custom_call.1} parent=11 // pred_fallthru
          _
      $region12: #{tpu_custom_call.1} parent=5 // pred_fallthru
        _
      %p186 = scmp.lt.s32.totalorder %s13, 2
      // Predicated region
      $region17: #{tpu_custom_call.1} parent=5 // pred_check
        %p187 = pneg %p186
      $region18: #{tpu_custom_call.1} parent=5 // pred_check_branch
        %189 = sbr.rel (%p187) target = $region20
      $region19: #{tpu_custom_call.1} parent=5 // pred_region
        // Predicated region
        $region21: #{tpu_custom_call.1} parent=19 // pred_check
          %p190 = pneg %p45
        $region22: #{tpu_custom_call.1} parent=19 // pred_check_branch
          %192 = sbr.rel (%p190) target = $region24
        $region23: #{tpu_custom_call.1} parent=19 // pred_region
          %s193 = sand.u32 %s13, 1
          %s194 = scalar_lea.sflag [#allocation4], %s193
          %s195 = sand.u32 %s35, 1
          %s196 = smul.addr %s195, 8
          %s197 = scalar_lea.vmem [#allocation3], %s196
          %s199 = ssub.s32 128, 128
          %200 = vsyncadd %s194, %s199
          %s201 = smul.addr %s20, 128
          %s202 = scalar_lea.hbm %s0, %s201
          %s204 = sshll.u32 %s197, 4
          %s205 = int_to_ptr.vmem [resolvable:$true] %s204
          %207 = dma.hbm_to_vmem [thread:$0]  %s202, 128, %s205, %s194
        $region24: #{tpu_custom_call.1} parent=19 // pred_fallthru
          _
        // Predicated region
        $region25: #{tpu_custom_call.1} parent=19 // pred_check
          %p208 = pneg %p123
        $region26: #{tpu_custom_call.1} parent=19 // pred_check_branch
          %210 = sbr.rel (%p208) target = $region28
        $region27: #{tpu_custom_call.1} parent=19 // pred_region
          %s211 = sand.u32 %s13, 1
          %s212 = scalar_lea.sflag [#allocation4], %s211
          %s213 = sand.u32 %s113, 1
          %s214 = smul.addr %s213, 8
          %s215 = scalar_lea.vmem [#allocation7], %s214
          %s216 = sadd.s32 %s20, 1
          %p217 = scmp.lt.s32.totalorder %s216, 0
          %s218 = ssub.s32 0, %s216
          %s219 = scalar_select %p217, %s218, %s216
          %s220 = sand.u32 %s219, 1
          %s221 = ssub.s32 0, %s220
          %s222 = scalar_select %p217, %s221, %s220
          %p223 = scmp.ne.s32.totalorder %s222, 0
          %p224 = scmp.lt.s32.totalorder %s222, 0
          %p225 = pnand %p224, %p223
          %p226 = pneg %p225
          %s227 = sadd.s32 %s222, 2
          %s228 = scalar_select %p226, %s227, %s222
          %s230 = ssub.s32 128, 128
          %231 = vsyncadd %s212, %s230
          %s232 = smul.addr %s228, 128
          %s233 = scalar_lea.hbm %s2, %s232
          %s235 = sshll.u32 %s215, 4
          %s236 = int_to_ptr.vmem [resolvable:$true] %s235
          %238 = dma.hbm_to_vmem [thread:$0]  %s233, 128, %s236, %s212
        $region28: #{tpu_custom_call.1} parent=19 // pred_fallthru
          _
      $region20: #{tpu_custom_call.1} parent=5 // pred_fallthru
        _
      %p239 = scmp.le.s32.totalorder 1, %s13
      %p240 = scmp.lt.s32.totalorder %s13, 3
      %p241 = pnand %p239, %p240
      %p242 = pneg %p241
      // Predicated region
      $region29: #{tpu_custom_call.1} parent=5 // pred_check
        _
      $region30: #{tpu_custom_call.1} parent=5 // pred_check_branch
        %244 = sbr.rel (%p241) target = $region32
      $region31: #{tpu_custom_call.1} parent=5 // pred_region
        %s245 = ssub.s32 %s13, 1
        %s246 = sand.u32 %s18, 1
        %s247 = scalar_lea.sflag [#allocation4], %s246
        %s248 = sand.u32 %s38, 1
        %s249 = smul.addr %s248, 8
        %s250 = scalar_lea.vmem [#allocation3], %s249
        // Predicated region
        $region33: #{tpu_custom_call.1} parent=31 // pred_check
          %p251 = pneg %p51
        $region34: #{tpu_custom_call.1} parent=31 // pred_check_branch
          %253 = sbr.rel (%p251) target = $region36
        $region35: #{tpu_custom_call.1} parent=31 // pred_region
          %254 = dma.done %s247, 128
        $region36: #{tpu_custom_call.1} parent=31 // pred_fallthru
          _
        // Predicated region
        $region37: #{tpu_custom_call.1} parent=31 // pred_check
          %p255 = pneg %p77
        $region38: #{tpu_custom_call.1} parent=31 // pred_check_branch
          %257 = sbr.rel (%p255) target = $region40
        $region39: #{tpu_custom_call.1} parent=31 // pred_region
          %258 = dma.done [#allocation6], 256
        $region40: #{tpu_custom_call.1} parent=31 // pred_fallthru
          _
        %s259 = sand.u32 %s18, 1
        %s260 = scalar_lea.sflag [#allocation4], %s259
        %s261 = sand.u32 %s116, 1
        %s262 = smul.addr %s261, 8
        %s263 = scalar_lea.vmem [#allocation7], %s262
        // Predicated region
        $region41: #{tpu_custom_call.1} parent=31 // pred_check
          %p264 = pneg %p129
        $region42: #{tpu_custom_call.1} parent=31 // pred_check_branch
          %266 = sbr.rel (%p264) target = $region44
        $region43: #{tpu_custom_call.1} parent=31 // pred_region
          %267 = dma.done %s260, 128
        $region44: #{tpu_custom_call.1} parent=31 // pred_fallthru
          _
        %s268 = sand.u32 %s18, 1
        %s269 = scalar_lea.sflag [#allocation4], %s268
        %s270 = sand.u32 %s38, 1
        %s271 = smul.addr %s270, 8
        %s272 = scalar_lea.vmem [#allocation3], %s271
        %p273 = pneg %p51
        %p274 = pneg %p48
        %p275 = pneg %p77
        %p276 = pneg %p74
        %s277 = sand.u32 %s18, 1
        %s278 = scalar_lea.sflag [#allocation4], %s277
        %s279 = sand.u32 %s116, 1
        %s280 = smul.addr %s279, 8
        %s281 = scalar_lea.vmem [#allocation7], %s280
        %p282 = pneg %p129
        %p283 = pneg %p126
        %p284 = pneg %p155
        %p285 = pneg %p152
        %p286 = scmp.lt.s32.totalorder %s22, 1
        %s287 = scalar_select %p286, %s22, 1
        %s288 = smul.addr %s287, 8
        %s289 = scalar_lea.vmem %s3, %s288
        %s290 = smul.u32 2, %s23
        %s291 = sadd.s32 %s22, 1
        %p292 = scmp.lt.s32.totalorder %s291, 0
        %s293 = ssub.s32 0, %s291
        %s294 = scalar_select %p292, %s293, %s291
        %s295 = sand.u32 %s294, 1
        %s296 = ssub.s32 0, %s295
        %s297 = scalar_select %p292, %s296, %s295
        %p298 = scmp.ne.s32.totalorder %s297, 0
        %p299 = scmp.lt.s32.totalorder %s297, 0
        %p300 = pnand %p299, %p298
        %p301 = pneg %p300
        %s302 = sadd.s32 %s297, 2
        %s303 = scalar_select %p301, %s302, %s297
        %p304 = scmp.lt.s32.totalorder %s22, 1
        %s305 = scalar_select %p304, %s22, 1
        %s306 = smul.addr %s305, 8
        %s307 = scalar_lea.vmem %s3, %s306
        %p309 = scmp.eq.s32.totalorder %s23, 0
        // Predicated region
        $region45: #{tpu_custom_call.1} parent=31 // pred_check
          %p310 = pneg %p309
        $region46: #{tpu_custom_call.1} parent=31 // pred_check_branch
          %312 = sbr.rel (%p310) target = $region48
        $region47: #{tpu_custom_call.1} parent=31 // pred_region
          %vm313 = vcmask 7168
          %314 = vst.msk [vmem:[#allocation2] sm:$0xff] %vm313, 0.0
        $region48: #{tpu_custom_call.1} parent=31 // pred_fallthru
          _
        %v315 = vld [vmem:[%s250] sm:$0xff]
        %v316 = vmul.f32 %v315, %v315
        %vm317 = vcmask 261120
        %v318 = vsel %vm317, %v316, 0.0
        %319 = vadd.xlane.f32.xlu0 %v318
        %v320 = vpop.xlane.xlu0 %319
        %v321 = vmax.f32 %v320, 1e-08
        %v322 = vrsqrt.pop %v321
        %v323 = vmul.f32 %v322, 1.4142135
        %v324 = vmul.f32 %v315, %v323
        %v325 = vpack.c.bf16 %v324, %v324
        %v326 = vld [vmem:[#allocation5] sm:$0xff]
        %v327 = vld [vmem:[#allocation5 + $0x8] sm:$0xff]
        %v328 = vmul.f32 %v326, %v326
        %v329 = vmul.f32 %v327, %v327
        %v330 = vsel %vm317, %v328, 0.0
        %331 = vadd.xlane.f32.xlu0 %v330
        %v332 = vpop.xlane.xlu0 %331
        %v333 = vsel %vm317, %v329, 0.0
        %334 = vadd.xlane.f32.xlu0 %v333
        %v335 = vpop.xlane.xlu0 %334
        %v336 = vmax.f32 %v332, 1e-08
        %v337 = vmax.f32 %v335, 1e-08
        %v338 = vrsqrt.pop %v336
        %v339 = vrsqrt.pop %v337
        %v340 = vmul.f32 %v338, 1.4142135
        %v341 = vmul.f32 %v339, 1.4142135
        %v342 = vmul.f32 %v326, %v340
        %v343 = vmul.f32 %v327, %v341
        %v344 = vpack.c.bf16 %v343, %v342
        %v346 = vsel %vm317, %v325, 0
        %v349 = vsel %vm317, %v344, 0
        %351 = vmatprep.subr.bf16.mxu0 0
        %352 = vmatpush1.bf16.xpose.msra.mxu0 %v349
        %353 = vmatprep.subr.bf16.mxu0 0
        %354 = vmatpush1.bf16.xpose.msra.mxu0 0
        %355 = vmatprep.subr.bf16.mxu0 0
        %356 = vmatpush1.bf16.xpose.msra.mxu0 0
        %357 = vmatprep.subr.bf16.mxu0 0
        %358 = vmatpush1.bf16.xpose.msra.mxu0 0
        %359 = vmatprep.subr.bf16.mxu0 0
        %360 = vmatpush1.bf16.xpose.msra.mxu0 0
        %361 = vmatprep.subr.bf16.mxu0 0
        %362 = vmatpush1.bf16.xpose.msra.mxu0 0
        %363 = vmatprep.subr.bf16.mxu0 0
        %364 = vmatpush1.bf16.xpose.msra.mxu0 0
        %365 = vmatprep.subr.bf16.mxu0 0
        %366 = vmatpush1.bf16.xpose.msra.mxu0 0
        %367 = vmatprep.subr.bf16.mxu0 0
        %368 = vmatpush1.bf16.xpose.msra.mxu0 0
        %369 = vmatprep.subr.bf16.mxu0 0
        %370 = vmatpush1.bf16.xpose.msra.mxu0 0
        %371 = vmatprep.subr.bf16.mxu0 0
        %372 = vmatpush1.bf16.xpose.msra.mxu0 0
        %373 = vmatprep.subr.bf16.mxu0 0
        %374 = vmatpush1.bf16.xpose.msra.mxu0 0
        %375 = vmatprep.subr.bf16.mxu0 0
        %376 = vmatpush1.bf16.xpose.msra.mxu0 0
        %377 = vmatprep.subr.bf16.mxu0 0
        %378 = vmatpush1.bf16.xpose.msra.mxu0 0
        %379 = vmatprep.subr.bf16.mxu0 0
        %380 = vmatpush1.bf16.xpose.msra.mxu0 0
        %381 = vmatprep.subr.bf16.mxu0 0
        %382 = vmatpush1.bf16.xpose.msra.mxu0 0
        %383 = vmatprep.mubr.bf16.mxu0 0
        %384 = vmatmul.mubr.bf16.gmra.mrb[0].mxu0 %v346
        %v385 = vpop.f32.mrb[0].mxu0
        %v386 = vadd.f32 0.0, %v385
        %v387 = vpop.f32.mrb[0].mxu0
        %v388 = vpop.f32.mrb[0].mxu0
        %v389 = vpop.f32.mrb[0].mxu0
        %390 = vdwg.mxu0
        %v391 = vld [vmem:[#allocation2] sm:$0xff]
        %v392 = vsub.f32 %v386, 2.0
        %v393 = vmul.f32 %v392, 1.442695
        %v394 = vpow.pop %v393
        %vm395 = vcmask 130048
        %v396 = vsel %vm395, %v394, 0.0
        %397 = vadd.xlane.f32.xlu0 %v396
        %v398 = vpop.xlane.xlu0 %397
        %v399 = vadd.f32 %v391, %v398
        %vm400 = vcmask 7168
        %401 = vst.msk [vmem:[#allocation2] sm:$0xff] %vm400, %v399
        // Predicated region
        $region49: #{tpu_custom_call.1} parent=31 // pred_check
          %p402 = pneg %p309
        $region50: #{tpu_custom_call.1} parent=31 // pred_check_branch
          %404 = sbr.rel (%p402) target = $region52
        $region51: #{tpu_custom_call.1} parent=31 // pred_region
          %v405 = vunpack.c.l.bf16 %v325
          %v406 = vmul.f32 %v405, %v405
          %v407 = vsel %vm317, %v406, 0.0
          %408 = vadd.xlane.f32.xlu0 %v407
          %v409 = vpop.xlane.xlu0 %408
          %v410 = vld [vmem:[%s263] sm:$0xff]
          %v411 = vmul.f32 %v410, %v410
          %v412 = vsel %vm317, %v411, 0.0
          %413 = vadd.xlane.f32.xlu0 %v412
          %v414 = vpop.xlane.xlu0 %413
          %v415 = vmax.f32 %v414, 1e-08
          %v416 = vrsqrt.pop %v415
          %v417 = vmul.f32 %v416, 1.4142135
          %v418 = vmul.f32 %v410, %v417
          %v419 = vpack.c.bf16 %v418, %v418
          %v420 = vunpack.c.l.bf16 %v419
          %v421 = vmul.f32 %v405, %v420
          %v422 = vsel %vm317, %v421, 0.0
          %423 = vadd.xlane.f32.xlu0 %v422
          %v424 = vpop.xlane.xlu0 %423
          %v425 = vld [vmem:[#allocation2] sm:$0xff]
          %v426 = vsub.f32 %v409, 2.0
          %v427 = vmul.f32 %v426, 1.442695
          %v428 = vpow.pop %v427
          %v429 = vsub.f32 %v425, %v428
          %v430 = vlog2.pop %v429
          %v431 = vmul.f32 %v430, 0.6931472
          %v432 = vadd.f32 %v431, 2.0
          %v433 = vsub.f32 %v432, %v424
          %434 = vst.msk [vmem:[%s307] sm:$0xff] %vm400, %v433
        $region52: #{tpu_custom_call.1} parent=31 // pred_fallthru
          _
        %p435 = scmp.lt.s32.totalorder %s22, 1
        %s436 = scalar_select %p435, %s22, 1
        %s437 = smul.addr %s436, 8
        %s438 = scalar_lea.vmem %s3, %s437
        // Predicated region
        $region53: #{tpu_custom_call.1} parent=31 // pred_check
          %p439 = pneg %p152
        $region54: #{tpu_custom_call.1} parent=31 // pred_check_branch
          %441 = sbr.rel (%p439) target = $region56
        $region55: #{tpu_custom_call.1} parent=31 // pred_region
          _
        $region56: #{tpu_custom_call.1} parent=31 // pred_fallthru
          _
      $region32: #{tpu_custom_call.1} parent=5 // pred_fallthru
        _
      %p442 = scmp.le.s32.totalorder 2, %s13
      // Predicated region
      $region57: #{tpu_custom_call.1} parent=5 // pred_check
        %p443 = pneg %p442
      $region58: #{tpu_custom_call.1} parent=5 // pred_check_branch
        %445 = sbr.rel (%p443) target = $region60
      $region59: #{tpu_custom_call.1} parent=5 // pred_region
        %s446 = ssub.s32 %s13, 2
        // Predicated region
        $region61: #{tpu_custom_call.1} parent=59 // pred_check
          %p447 = pneg %p158
        $region62: #{tpu_custom_call.1} parent=59 // pred_check_branch
          %449 = sbr.rel (%p447) target = $region64
        $region63: #{tpu_custom_call.1} parent=59 // pred_region
          %p450 = scmp.lt.s32.totalorder %s24, 1
          %s451 = scalar_select %p450, %s24, 1
          %s452 = smul.addr %s451, 8
          %s453 = scalar_lea.vmem %s3, %s452
        $region64: #{tpu_custom_call.1} parent=59 // pred_fallthru
          _
      $region60: #{tpu_custom_call.1} parent=5 // pred_fallthru
        _
    $region6: #{tpu_custom_call.1} parent=1 // loop_footer
      %s17 = sadd.s32 1, %s13
    $region7: #{tpu_custom_call.1} parent=1 // loop_footer_branch
      %12 = sbr.rel target = $region3
    $region8: #{tpu_custom_call.1} parent=1 // loop_exit
      _
    %454 = vsyncpa [#allocation4], 1
    %s455 = scalar_lea.sflag [#allocation4], 1
    %456 = vsyncpa %s455, 1
    %457 = vsyncpa [#allocation6], 1

</llo_original>
